<compile_context>
chip_gen: v5e
topology: v5e:2x2
jax: 0.10.0
libtpu: 0.0.40
codegen_flags: <defaults>
</compile_context>

<pallas_src>
import jax
import jax.numpy as jnp
from jax.experimental import pallas as pl
from jax.experimental.pallas import tpu as pltpu

OBS_DIMS = 12       # Hopper-v4 observation dims (positions included)
ACT_DIMS = 3        # Hopper-v4 action dims
HIDDEN1 = 16
HIDDEN2 = 32
LANES = 128         # lane width of the packed parameter slab / batch tiles

# Row layout of the packed (transposed) parameter slab.
ROW_W1T = 0                      # rows   0..15  : W1^T (16, 12)
ROW_B1 = 16                      # rows  16..31  : b1   (16, 1)
ROW_W2T = 32                     # rows  32..63  : W2^T (32, 16)
ROW_B2 = 64                      # rows  64..95  : b2   (32, 1)
ROW_WHT = 96                     # rows  96..101 : [Wm | Ws]^T (6, 32)
ROW_BH = 104                     # rows 104..109 : [bm | bs]^T (6, 1)
PARAM_ROWS = 112                 # multiple of 8


def _cdiv(a, b):
    return (a + b - 1) // b


def _round_up(a, m):
    return _cdiv(a, m) * m


def policy_kernel(x_ref, p_ref, mean_ref, std_ref):
    p = p_ref[...]                                            # (112, 128) f32

    w1t = p[ROW_W1T:ROW_W1T + HIDDEN1, :OBS_DIMS]             # (16, 12)
    b1 = p[ROW_B1:ROW_B1 + HIDDEN1, :1]                       # (16, 1)
    w2t = p[ROW_W2T:ROW_W2T + HIDDEN2, :HIDDEN1]              # (32, 16)
    b2 = p[ROW_B2:ROW_B2 + HIDDEN2, :1]                       # (32, 1)
    wht = p[ROW_WHT:ROW_WHT + 2 * ACT_DIMS, :HIDDEN2]         # (6, 32) = [Wm|Ws]^T
    bh = p[ROW_BH:ROW_BH + 2 * ACT_DIMS, :1]                  # (6, 1)

    # Put the batch in the 128-lane axis: (TB, 12) -> (12, TB).  The in-kernel
    # transpose runs on the XLU, whose issue slot is otherwise idle here.
    xt = x_ref[...].T                                         # (12, TB)

    # shared_net: Linear -> Tanh -> Linear -> Tanh, computed transposed.
    h1 = jnp.tanh(jnp.dot(w1t, xt, preferred_element_type=jnp.float32) + b1)   # (16, TB)
    h2 = jnp.tanh(jnp.dot(w2t, h1, preferred_element_type=jnp.float32) + b2)   # (32, TB)

    # Fused mean/std head: one MXU push, rows 0..2 = mean, rows 3..5 = std-raw.
    y = jnp.dot(wht, h2, preferred_element_type=jnp.float32) + bh               # (6, TB)

    mean_ref[...] = y[:ACT_DIMS, :]                           # raw mean rows
    z = y[ACT_DIMS:2 * ACT_DIMS, :]
    # Numerically stable softplus, applied only to the std rows.
    std_ref[...] = jnp.maximum(z, 0.0) + jnp.log1p(jnp.exp(-jnp.abs(z)))


def pack_params(params):
    """Pack the 8 parameter arrays into one (PARAM_ROWS, 128) f32 slab.

    Parameter convention here is (in, out) for weights and (1, out) for biases,
    i.e. already the transpose of PyTorch's nn.Linear weight (out, in).  When
    loading a real PyTorch state_dict, transpose each Linear weight first.
    """
    w1, b1, w2, b2, wm, bm, ws, bs = params
    wh_t = jnp.concatenate([wm, ws], axis=1).T                # (6, 32)
    bh = jnp.concatenate([bm.reshape(1, -1), bs.reshape(1, -1)], axis=1).reshape(-1, 1)

    slab = jnp.zeros((PARAM_ROWS, LANES), jnp.float32)
    slab = slab.at[ROW_W1T:ROW_W1T + HIDDEN1, :OBS_DIMS].set(w1.T)
    slab = slab.at[ROW_B1:ROW_B1 + HIDDEN1, :1].set(b1.reshape(-1, 1))
    slab = slab.at[ROW_W2T:ROW_W2T + HIDDEN2, :HIDDEN1].set(w2.T)
    slab = slab.at[ROW_B2:ROW_B2 + HIDDEN2, :1].set(b2.reshape(-1, 1))
    slab = slab.at[ROW_WHT:ROW_WHT + 2 * ACT_DIMS, :HIDDEN2].set(wh_t)
    slab = slab.at[ROW_BH:ROW_BH + 2 * ACT_DIMS, :1].set(bh)
    return slab


def _pick_tile(batch, tile_b):
    """Batch tile: multiple of 128 (lane width), <= tile_b; for large batches
    capped so the grid has >= 2 steps (v7x has two TensorCores)."""
    tb = min(_round_up(tile_b, LANES), _round_up(batch, LANES))
    if batch >= 2 * LANES:
        tb = min(tb, max(LANES, _round_up(_cdiv(batch, 2), LANES)))
    return tb


def policy_network_forward(x, params, *, tile_b=2048):
    """x: (B, OBS_DIMS). Returns (action_means, action_stddevs), each (B, ACT_DIMS)."""
    x = jnp.asarray(x, jnp.float32)                 # PyTorch: x.float()
    B = x.shape[0]
    slab = pack_params(params)

    TB = _pick_tile(B, tile_b)
    grid = _cdiv(B, TB)                             # ragged tail handled by partial blocks

    mean_t, std_t = pl.pallas_call(
        policy_kernel,
        out_shape=(
            jax.ShapeDtypeStruct((ACT_DIMS, B), jnp.float32),   # mean, batch in lanes
            jax.ShapeDtypeStruct((ACT_DIMS, B), jnp.float32),   # std,  batch in lanes
        ),
        grid_spec=pltpu.PrefetchScalarGridSpec(
            num_scalar_prefetch=0,
            grid=(grid,),
            in_specs=[
                pl.BlockSpec((TB, OBS_DIMS), lambda i: (i, 0)),        # x tile
                pl.BlockSpec((PARAM_ROWS, LANES), lambda i: (0, 0)),   # resident params
            ],
            out_specs=[
                pl.BlockSpec((ACT_DIMS, TB), lambda i: (0, i)),        # mean (lane-dense)
                pl.BlockSpec((ACT_DIMS, TB), lambda i: (0, i)),        # std  (lane-dense)
            ],
        ),
        compiler_params=pltpu.CompilerParams(
            dimension_semantics=("parallel",),
        ),
    )(x, slab)

    # Row slices of the transposed outputs -> (B, ACT_DIMS), matching PyTorch.
    return mean_t.T, std_t.T


def init_params(key):
    """Deterministic init. Weights stored as (in, out); biases as (1, out)."""
    ks = jax.random.split(key, 8)

    def linear(kw, kb, fan_in, fan_out):
        # mimic PyTorch nn.Linear default: U(-1/sqrt(fan_in), 1/sqrt(fan_in))
        bound = 1.0 / jnp.sqrt(jnp.float32(fan_in))
        w = jax.random.uniform(kw, (fan_in, fan_out), jnp.float32, -bound, bound)
        b = jax.random.uniform(kb, (1, fan_out), jnp.float32, -bound, bound)
        return w, b

    w1, b1 = linear(ks[0], ks[1], OBS_DIMS, HIDDEN1)
    w2, b2 = linear(ks[2], ks[3], HIDDEN1, HIDDEN2)
    wm, bm = linear(ks[4], ks[5], HIDDEN2, ACT_DIMS)
    ws, bs = linear(ks[6], ks[7], HIDDEN2, ACT_DIMS)
    return (w1, b1, w2, b2, wm, bm, ws, bs)


def reference_forward(x, params):
    """Pure-JAX reference for correctness check."""
    w1, b1, w2, b2, wm, bm, ws, bs = params
    x = x.astype(jnp.float32)
    h1 = jnp.tanh(x @ w1 + b1)
    h2 = jnp.tanh(h1 @ w2 + b2)
    mean = h2 @ wm + bm
    std = jax.nn.softplus(h2 @ ws + bs)
    return mean, std


if __name__ == "__main__":
    key = jax.random.PRNGKey(0)
    kp, kx1, kx2 = jax.random.split(key, 3)

    params = init_params(kp)

    # Case 1: ragged small batch -> single grid step with a partial (masked) tile.
    B1 = 200
    x1 = jax.random.normal(kx1, (B1, OBS_DIMS), jnp.float32)
    mean1, std1 = policy_network_forward(x1, params)
    mean1 = jax.block_until_ready(mean1)
    std1 = jax.block_until_ready(std1)
    rm1, rs1 = reference_forward(x1, params)
    assert mean1.shape == (B1, ACT_DIMS) and std1.shape == (B1, ACT_DIMS)
    assert jnp.allclose(mean1, rm1, atol=1e-5, rtol=1e-5)
    assert jnp.allclose(std1, rs1, atol=1e-5, rtol=1e-5)
    assert bool(jnp.all(std1 > 0.0))

    # Case 2: multi-step grid -> exercises the resident-param index map and the
    # batch pipeline (3 exact tiles of 128).
    B2 = 384
    x2 = jax.random.normal(kx2, (B2, OBS_DIMS), jnp.float32)
    mean2, std2 = policy_network_forward(x2, params, tile_b=128)
    mean2 = jax.block_until_ready(mean2)
    std2 = jax.block_until_ready(std2)
    rm2, rs2 = reference_forward(x2, params)
    assert jnp.allclose(mean2, rm2, atol=1e-5, rtol=1e-5)
    assert jnp.allclose(std2, rs2, atol=1e-5, rtol=1e-5)
    assert bool(jnp.all(std2 > 0.0))

    print("KERNEL_OK")
</pallas_src>

<mosaic_0001>
module attributes {stable_mosaic.version = 11 : i64} {
  func.func @policy_kernel(%arg0: i32, %arg1: memref<256x12xf32, #tpu.memory_space<vmem>>, %arg2: memref<112x128xf32, #tpu.memory_space<vmem>>, %arg3: memref<3x256xf32, #tpu.memory_space<vmem>>, %arg4: memref<3x256xf32, #tpu.memory_space<vmem>>) attributes {dimension_semantics = [#tpu.dimension_semantics<parallel>], iteration_bounds = array<i64: 1>, scalar_prefetch = 0 : i64, scratch_operands = 0 : i64, tpu.core_type = #tpu.core_type<tc>, window_params = [{transform_indices = @transform_0, window_bounds = array<i64: 256, 12>}, {pipeline_mode = #tpu.pipeline_mode<synchronous>, transform_indices = @transform_1, window_bounds = array<i64: 112, 128>}, {transform_indices = @transform_2, window_bounds = array<i64: 3, 256>}, {transform_indices = @transform_3, window_bounds = array<i64: 3, 256>}]} {
    %c0 = arith.constant 0 : index
    %c0_0 = arith.constant 0 : index
    %0 = vector.load %arg2[%c0, %c0_0] : memref<112x128xf32, #tpu.memory_space<vmem>>, vector<112x128xf32>
    %1 = vector.extract_strided_slice %0 {offsets = [0, 0], sizes = [16, 12], strides = [1, 1]} : vector<112x128xf32> to vector<16x12xf32>
    %2 = vector.extract_strided_slice %0 {offsets = [16, 0], sizes = [16, 1], strides = [1, 1]} : vector<112x128xf32> to vector<16x1xf32>
    %3 = vector.extract_strided_slice %0 {offsets = [32, 0], sizes = [32, 16], strides = [1, 1]} : vector<112x128xf32> to vector<32x16xf32>
    %4 = vector.extract_strided_slice %0 {offsets = [64, 0], sizes = [32, 1], strides = [1, 1]} : vector<112x128xf32> to vector<32x1xf32>
    %5 = vector.extract_strided_slice %0 {offsets = [96, 0], sizes = [6, 32], strides = [1, 1]} : vector<112x128xf32> to vector<6x32xf32>
    %6 = vector.extract_strided_slice %0 {offsets = [104, 0], sizes = [6, 1], strides = [1, 1]} : vector<112x128xf32> to vector<6x1xf32>
    %c0_1 = arith.constant 0 : index
    %c0_2 = arith.constant 0 : index
    %7 = vector.load %arg1[%c0_1, %c0_2] : memref<256x12xf32, #tpu.memory_space<vmem>>, vector<256x12xf32>
    %8 = tpu.transpose %7, [1, 0] : vector<256x12xf32> -> vector<12x256xf32>
    %cst = arith.constant dense<0.000000e+00> : vector<16x256xf32>
    %9 = tpu.matmul %1, %8, %cst {dimension_numbers = #tpu.dot_dimension_numbers<[1], [0], [0], [1], [0, 0, 1, 1], [], []>} : vector<16x12xf32>, vector<12x256xf32>, vector<16x256xf32> -> vector<16x256xf32>
    %10 = vector.broadcast %2 : vector<16x1xf32> to vector<16x256xf32>
    %11 = arith.addf %9, %10 : vector<16x256xf32>
    %12 = math.tanh %11 : vector<16x256xf32>
    %cst_3 = arith.constant dense<0.000000e+00> : vector<32x256xf32>
    %13 = tpu.matmul %3, %12, %cst_3 {dimension_numbers = #tpu.dot_dimension_numbers<[1], [0], [0], [1], [0, 0, 1, 1], [], []>} : vector<32x16xf32>, vector<16x256xf32>, vector<32x256xf32> -> vector<32x256xf32>
    %14 = vector.broadcast %4 : vector<32x1xf32> to vector<32x256xf32>
    %15 = arith.addf %13, %14 : vector<32x256xf32>
    %16 = math.tanh %15 : vector<32x256xf32>
    %cst_4 = arith.constant dense<0.000000e+00> : vector<6x256xf32>
    %17 = tpu.matmul %5, %16, %cst_4 {dimension_numbers = #tpu.dot_dimension_numbers<[1], [0], [0], [1], [0, 0, 1, 1], [], []>} : vector<6x32xf32>, vector<32x256xf32>, vector<6x256xf32> -> vector<6x256xf32>
    %18 = vector.broadcast %6 : vector<6x1xf32> to vector<6x256xf32>
    %19 = arith.addf %17, %18 : vector<6x256xf32>
    %20 = vector.extract_strided_slice %19 {offsets = [0, 0], sizes = [3, 256], strides = [1, 1]} : vector<6x256xf32> to vector<3x256xf32>
    %c0_5 = arith.constant 0 : index
    %c0_6 = arith.constant 0 : index
    %21 = vector.load %arg3[%c0_5, %c0_6] : memref<3x256xf32, #tpu.memory_space<vmem>>, vector<3x256xf32>
    tpu.vector_store %arg3[%c0_5, %c0_6], %20 {strides = array<i32>} : memref<3x256xf32, #tpu.memory_space<vmem>>, vector<3x256xf32>,
    %22 = vector.extract_strided_slice %19 {offsets = [3, 0], sizes = [3, 256], strides = [1, 1]} : vector<6x256xf32> to vector<3x256xf32>
    %cst_7 = arith.constant 0.000000e+00 : f32
    %23 = vector.broadcast %cst_7 : f32 to vector<3x256xf32>
    %24 = arith.maximumf %22, %23 : vector<3x256xf32>
    %25 = math.absf %22 : vector<3x256xf32>
    %cst_8 = arith.constant 0.000000e+00 : f32
    %26 = vector.broadcast %cst_8 : f32 to vector<3x256xf32>
    %27 = arith.subf %26, %25 : vector<3x256xf32>
    %28 = math.exp %27 : vector<3x256xf32>
    %29 = math.log1p %28 : vector<3x256xf32>
    %30 = arith.addf %24, %29 : vector<3x256xf32>
    %c0_9 = arith.constant 0 : index
    %c0_10 = arith.constant 0 : index
    %31 = vector.load %arg4[%c0_9, %c0_10] : memref<3x256xf32, #tpu.memory_space<vmem>>, vector<3x256xf32>
    tpu.vector_store %arg4[%c0_9, %c0_10], %30 {strides = array<i32>} : memref<3x256xf32, #tpu.memory_space<vmem>>, vector<3x256xf32>,
    return
  }
  func.func @transform_0(%arg0: i32) -> (i32, i32) {
    %c0_i32 = arith.constant 0 : i32
    %c0_i32_0 = arith.constant 0 : i32
    return %arg0, %c0_i32 : i32, i32
  }
  func.func @transform_1(%arg0: i32) -> (i32, i32) {
    %c0_i32 = arith.constant 0 : i32
    %c0_i32_0 = arith.constant 0 : i32
    %c0_i32_1 = arith.constant 0 : i32
    return %c0_i32, %c0_i32_0 : i32, i32
  }
  func.func @transform_2(%arg0: i32) -> (i32, i32) {
    %c0_i32 = arith.constant 0 : i32
    %c0_i32_0 = arith.constant 0 : i32
    return %c0_i32, %arg0 : i32, i32
  }
  func.func @transform_3(%arg0: i32) -> (i32, i32) {
    %c0_i32 = arith.constant 0 : i32
    %c0_i32_0 = arith.constant 0 : i32
    return %c0_i32, %arg0 : i32, i32
  }
}

</mosaic_0001>

<llo_original>
// kernel: tpu_custom_call.1
$region0: #{tpu_custom_call.1}
  #allocation0 [shape = 'u32[]', space=smem, size = 0x4, offset = 0x4, fixed_abs, tag = 'smem constant byte address 0x4 - core index']
  #allocation1 [shape = 'u32[72,128]{1,0:T(1,128)}', space=vmem, size = 0x9000, scoped, tag = 'internal scratch']
  %s0 = inlined_call_operand.vmem [shape: f32[200,12], index: 0, kind: input, shape index: {}]
  %s1 = inlined_call_operand.vmem [shape: f32[112,128], index: 1, kind: input, shape index: {}]
  %s2 = inlined_call_operand.hbm [shape: f32[3,200], index: 2, kind: output, shape index: {0}]
  %s3 = inlined_call_operand.hbm [shape: f32[3,200], index: 3, kind: output, shape index: {1}]
  %4 = xla_tuple %s2, %s3
  %s5 = sld [smem:[#allocation0]]
  $region26: #{tpu_custom_call.1} parent=0
    _
  %s7 = ssub.s32 1, %s5
  %s8 = scalar_select 0, %s7, %s5
  $region1: #{tpu_custom_call.1} parent=0
    #allocation2 [shape = 'u8[4096]{0}', space=vmem, size = 0x1000, scoped, tag = 'output window, operand 0, single buffered']
    #allocation3 [shape = 's32[1]{0}', space=sflag, size = 0x4, scoped, tag = 'scoped memory for tpu_custom_call.1']
    #allocation4 [shape = 'u8[4096]{0}', space=vmem, size = 0x1000, scoped, tag = 'output window, operand 1, single buffered']
    #allocation5 [shape = 's32[1]{0}', space=sflag, size = 0x4, scoped, tag = 'scoped memory for tpu_custom_call.1']
    %9 = vsyncpa [#allocation3], 0
    %10 = vsyncpa [#allocation5], 0
    // Predicated region
    $region2: #{tpu_custom_call.1} parent=1 // pred_check
      _
    $region3: #{tpu_custom_call.1} parent=1 // pred_check_branch
      %12 = sbr.rel (0) target = $region5
    $region4: #{tpu_custom_call.1} parent=1 // pred_region
      _
    $region5: #{tpu_custom_call.1} parent=1 // pred_fallthru
      _
    // Predicated region
    $region6: #{tpu_custom_call.1} parent=1 // pred_check
      _
    $region7: #{tpu_custom_call.1} parent=1 // pred_check_branch
      %14 = sbr.rel (0) target = $region9
    $region8: #{tpu_custom_call.1} parent=1 // pred_region
      _
    $region9: #{tpu_custom_call.1} parent=1 // pred_fallthru
      _
    %v15 = vld [vmem:[%s1] sm:$0xff]
    %v16 = vld [vmem:[%s1 + $0x8] sm:$0xff]
    %v17 = vld [vmem:[%s1 + $0x10] sm:$0xff]
    %v18 = vld [vmem:[%s1 + $0x18] sm:$0xff]
    %v19 = vld [vmem:[%s1 + $0x20] sm:$0xff]
    %v20 = vld [vmem:[%s1 + $0x28] sm:$0xff]
    %v21 = vld [vmem:[%s1 + $0x30] sm:$0xff]
    %v22 = vld [vmem:[%s1 + $0x38] sm:$0xff]
    %v23 = vld [vmem:[%s1 + $0x40] sm:$0xff]
    %v24 = vld [vmem:[%s1 + $0x48] sm:$0xff]
    %v25 = vld [vmem:[%s1 + $0x50] sm:$0xff]
    %v26 = vld [vmem:[%s1 + $0x58] sm:$0xff]
    %v27 = vld [vmem:[%s1 + $0x60] sm:$0xff]
    %v28 = vld [vmem:[%s1 + $0x68] sm:$0xff]
    %v29 = vld [vmem:[%s0] sm:$0xff]
    %v30 = vld [vmem:[%s0 + $0x8] sm:$0xff]
    %v31 = vld [vmem:[%s0 + $0x10] sm:$0xff]
    %v32 = vld [vmem:[%s0 + $0x18] sm:$0xff]
    %v33 = vld [vmem:[%s0 + $0x20] sm:$0xff]
    %v34 = vld [vmem:[%s0 + $0x28] sm:$0xff]
    %v35 = vld [vmem:[%s0 + $0x30] sm:$0xff]
    %v36 = vld [vmem:[%s0 + $0x38] sm:$0xff]
    %v37 = vld [vmem:[%s0 + $0x40] sm:$0xff]
    %v38 = vld [vmem:[%s0 + $0x48] sm:$0xff]
    %v39 = vld [vmem:[%s0 + $0x50] sm:$0xff]
    %v40 = vld [vmem:[%s0 + $0x58] sm:$0xff]
    %v41 = vld [vmem:[%s0 + $0x60] sm:$0xff]
    %v42 = vld [vmem:[%s0 + $0x68] sm:$0xff]
    %v43 = vld [vmem:[%s0 + $0x70] sm:$0xff]
    %v44 = vld [vmem:[%s0 + $0x78] sm:$0xff]
    %v45 = vld [vmem:[%s0 + $0x80] sm:$0xff]
    %v46 = vld [vmem:[%s0 + $0x88] sm:$0xff]
    %v47 = vld [vmem:[%s0 + $0x90] sm:$0xff]
    %v48 = vld [vmem:[%s0 + $0x98] sm:$0xff]
    %v49 = vld [vmem:[%s0 + $0xa0] sm:$0xff]
    %v50 = vld [vmem:[%s0 + $0xa8] sm:$0xff]
    %v51 = vld [vmem:[%s0 + $0xb0] sm:$0xff]
    %v52 = vld [vmem:[%s0 + $0xb8] sm:$0xff]
    %v53 = vld [vmem:[%s0 + $0xc0] sm:$0xff]
    %v54 = vld [vmem:[%s0 + $0xc8] sm:$0xff]
    %v55 = vld [vmem:[%s0 + $0xd0] sm:$0xff]
    %v56 = vld [vmem:[%s0 + $0xd8] sm:$0xff]
    %v57 = vld [vmem:[%s0 + $0xe0] sm:$0xff]
    %v58 = vld [vmem:[%s0 + $0xe8] sm:$0xff]
    %v59 = vld [vmem:[%s0 + $0xf0] sm:$0xff]
    %v60 = vld [vmem:[%s0 + $0xf8] sm:$0xff]
    %62 = vset.pattern.permute.xlu0 0
    %63 = vperm.xlu0 %62, %v17
    %v64 = vpop.permute.xlu0 %63
    %67 = vset.pattern.permute.xlu0 0
    %68 = vperm.xlu0 %67, %v18
    %v69 = vpop.permute.xlu0 %68
    %vm71 = vcmask 97280
    %v73 = vsel %vm71, %v15, 0
    %v76 = vsel %vm71, %v16, 0
    %v79 = vsel %vm71, %v29, 0
    %v82 = vsel %vm71, %v30, 0
    %v85 = vsel %vm71, %v31, 0
    %v88 = vsel %vm71, %v32, 0
    %v91 = vsel %vm71, %v33, 0
    %v94 = vsel %vm71, %v34, 0
    %v97 = vsel %vm71, %v35, 0
    %v100 = vsel %vm71, %v36, 0
    %v103 = vsel %vm71, %v37, 0
    %v106 = vsel %vm71, %v38, 0
    %v109 = vsel %vm71, %v39, 0
    %v112 = vsel %vm71, %v40, 0
    %v115 = vsel %vm71, %v41, 0
    %v118 = vsel %vm71, %v42, 0
    %v121 = vsel %vm71, %v43, 0
    %v124 = vsel %vm71, %v44, 0
    %v127 = vsel %vm71, %v45, 0
    %v130 = vsel %vm71, %v46, 0
    %v133 = vsel %vm71, %v47, 0
    %v136 = vsel %vm71, %v48, 0
    %v139 = vsel %vm71, %v49, 0
    %v142 = vsel %vm71, %v50, 0
    %v145 = vsel %vm71, %v51, 0
    %v148 = vsel %vm71, %v52, 0
    %v151 = vsel %vm71, %v53, 0
    %v154 = vsel %vm71, %v54, 0
    %v157 = vsel %vm71, %v55, 0
    %v160 = vsel %vm71, %v56, 0
    %v163 = vsel %vm71, %v57, 0
    %v166 = vsel %vm71, %v58, 0
    %v169 = vsel %vm71, %v59, 0
    %v172 = vsel %vm71, %v60, 0
    %174 = vmatpush.xpose.msra.mxu0 %v124
    %175 = vmatpush.xpose.msra.mxu0 %v121
    %176 = vmatpush.xpose.msra.mxu0 %v118
    %177 = vmatpush.xpose.msra.mxu0 %v115
    %178 = vmatpush.xpose.msra.mxu0 %v112
    %179 = vmatpush.xpose.msra.mxu0 %v109
    %180 = vmatpush.xpose.msra.mxu0 %v106
    %181 = vmatpush.xpose.msra.mxu0 %v103
    %182 = vmatpush.xpose.msra.mxu0 %v100
    %183 = vmatpush.xpose.msra.mxu0 %v97
    %184 = vmatpush.xpose.msra.mxu0 %v94
    %185 = vmatpush.xpose.msra.mxu0 %v91
    %186 = vmatpush.xpose.msra.mxu0 %v88
    %187 = vmatpush.xpose.msra.mxu0 %v85
    %188 = vmatpush.xpose.msra.mxu0 %v82
    %189 = vmatpush.xpose.msra.mxu0 %v79
    %190 = vmatmul.f32.gmra.mxu0 %v73
    %v191 = vpop.f32.mrf.mxu0
    %v192 = vadd.f32 %v64, %v191
    %193 = vmatmul.f32.gmra.mxu0 %v76
    %v194 = vpop.f32.mrf.mxu0
    %v195 = vadd.f32 %v69, %v194
    %196 = vdwg.mxu0
    %197 = vmatpush.xpose.msra.mxu0 %v172
    %198 = vmatpush.xpose.msra.mxu0 %v169
    %199 = vmatpush.xpose.msra.mxu0 %v166
    %200 = vmatpush.xpose.msra.mxu0 %v163
    %201 = vmatpush.xpose.msra.mxu0 %v160
    %202 = vmatpush.xpose.msra.mxu0 %v157
    %203 = vmatpush.xpose.msra.mxu0 %v154
    %204 = vmatpush.xpose.msra.mxu0 %v151
    %205 = vmatpush.xpose.msra.mxu0 %v148
    %206 = vmatpush.xpose.msra.mxu0 %v145
    %207 = vmatpush.xpose.msra.mxu0 %v142
    %208 = vmatpush.xpose.msra.mxu0 %v139
    %209 = vmatpush.xpose.msra.mxu0 %v136
    %210 = vmatpush.xpose.msra.mxu0 %v133
    %211 = vmatpush.xpose.msra.mxu0 %v130
    %212 = vmatpush.xpose.msra.mxu0 %v127
    %213 = vmatmul.f32.gmra.mxu0 %v73
    %v214 = vpop.f32.mrf.mxu0
    %v215 = vadd.f32 %v64, %v214
    %216 = vmatmul.f32.gmra.mxu0 %v76
    %v217 = vpop.f32.mrf.mxu0
    %v218 = vadd.f32 %v69, %v217
    %219 = vdwg.mxu0
    %v220 = vtanh.pop %v192
    %v221 = vtanh.pop %v215
    %v222 = vtanh.pop %v195
    %v223 = vtanh.pop %v218
    %225 = vset.pattern.permute.xlu0 0
    %226 = vperm.xlu0 %225, %v23
    %v227 = vpop.permute.xlu0 %226
    %230 = vset.pattern.permute.xlu0 0
    %231 = vperm.xlu0 %230, %v24
    %v232 = vpop.permute.xlu0 %231
    %235 = vset.pattern.permute.xlu0 0
    %236 = vperm.xlu0 %235, %v25
    %v237 = vpop.permute.xlu0 %236
    %240 = vset.pattern.permute.xlu0 0
    %241 = vperm.xlu0 %240, %v26
    %v242 = vpop.permute.xlu0 %241
    %vm244 = vcmask 130048
    %v246 = vsel %vm244, %v19, 0
    %v249 = vsel %vm244, %v20, 0
    %v252 = vsel %vm244, %v21, 0
    %v255 = vsel %vm244, %v22, 0
    %257 = vmatpush.msra.mxu0 0.0
    %258 = vmatpush.msra.mxu0 0.0
    %259 = vmatpush.msra.mxu0 0.0
    %260 = vmatpush.msra.mxu0 0.0
    %261 = vmatpush.msra.mxu0 0.0
    %262 = vmatpush.msra.mxu0 0.0
    %263 = vmatpush.msra.mxu0 0.0
    %264 = vmatpush.msra.mxu0 0.0
    %265 = vmatpush.msra.mxu0 0.0
    %266 = vmatpush.msra.mxu0 0.0
    %267 = vmatpush.msra.mxu0 0.0
    %268 = vmatpush.msra.mxu0 0.0
    %269 = vmatpush.msra.mxu0 0.0
    %270 = vmatpush.msra.mxu0 0.0
    %271 = vmatpush.msra.mxu0 %v222
    %272 = vmatpush.msra.mxu0 %v220
    %273 = vmatmul.f32.gmra.mxu0 %v246
    %v274 = vpop.f32.mrf.mxu0
    %v275 = vadd.f32 %v227, %v274
    %276 = vmatmul.f32.gmra.mxu0 %v249
    %v277 = vpop.f32.mrf.mxu0
    %v278 = vadd.f32 %v232, %v277
    %279 = vmatmul.f32.gmra.mxu0 %v252
    %v280 = vpop.f32.mrf.mxu0
    %v281 = vadd.f32 %v237, %v280
    %282 = vmatmul.f32.gmra.mxu0 %v255
    %v283 = vpop.f32.mrf.mxu0
    %v284 = vadd.f32 %v242, %v283
    %285 = vdwg.mxu0
    %286 = vmatpush.msra.mxu0 0.0
    %287 = vmatpush.msra.mxu0 0.0
    %288 = vmatpush.msra.mxu0 0.0
    %289 = vmatpush.msra.mxu0 0.0
    %290 = vmatpush.msra.mxu0 0.0
    %291 = vmatpush.msra.mxu0 0.0
    %292 = vmatpush.msra.mxu0 0.0
    %293 = vmatpush.msra.mxu0 0.0
    %294 = vmatpush.msra.mxu0 0.0
    %295 = vmatpush.msra.mxu0 0.0
    %296 = vmatpush.msra.mxu0 0.0
    %297 = vmatpush.msra.mxu0 0.0
    %298 = vmatpush.msra.mxu0 0.0
    %299 = vmatpush.msra.mxu0 0.0
    %300 = vmatpush.msra.mxu0 %v223
    %301 = vmatpush.msra.mxu0 %v221
    %302 = vmatmul.f32.gmra.mxu0 %v246
    %v303 = vpop.f32.mrf.mxu0
    %v304 = vadd.f32 %v227, %v303
    %305 = vmatmul.f32.gmra.mxu0 %v249
    %v306 = vpop.f32.mrf.mxu0
    %v307 = vadd.f32 %v232, %v306
    %308 = vmatmul.f32.gmra.mxu0 %v252
    %v309 = vpop.f32.mrf.mxu0
    %v310 = vadd.f32 %v237, %v309
    %311 = vmatmul.f32.gmra.mxu0 %v255
    %v312 = vpop.f32.mrf.mxu0
    %v313 = vadd.f32 %v242, %v312
    %314 = vdwg.mxu0
    %v315 = vtanh.pop %v275
    %v316 = vtanh.pop %v304
    %v317 = vtanh.pop %v278
    %v318 = vtanh.pop %v307
    %v319 = vtanh.pop %v281
    %v320 = vtanh.pop %v310
    %v321 = vtanh.pop %v284
    %v322 = vtanh.pop %v313
    %324 = vset.pattern.permute.xlu0 0
    %325 = vperm.xlu0 %324, %v28
    %v326 = vpop.permute.xlu0 %325
    %vm328 = vcmask 261120
    %v330 = vsel %vm328, %v27, 0
    %332 = vmatpush.msra.mxu0 0.0
    %333 = vmatpush.msra.mxu0 0.0
    %334 = vmatpush.msra.mxu0 0.0
    %335 = vmatpush.msra.mxu0 0.0
    %336 = vmatpush.msra.mxu0 0.0
    %337 = vmatpush.msra.mxu0 0.0
    %338 = vmatpush.msra.mxu0 0.0
    %339 = vmatpush.msra.mxu0 0.0
    %340 = vmatpush.msra.mxu0 0.0
    %341 = vmatpush.msra.mxu0 0.0
    %342 = vmatpush.msra.mxu0 0.0
    %343 = vmatpush.msra.mxu0 0.0
    %344 = vmatpush.msra.mxu0 %v321
    %345 = vmatpush.msra.mxu0 %v319
    %346 = vmatpush.msra.mxu0 %v317
    %347 = vmatpush.msra.mxu0 %v315
    %348 = vmatmul.f32.gmra.mxu0 %v330
    %v349 = vpop.f32.mrf.mxu0
    %v350 = vadd.f32 %v326, %v349
    %351 = vdwg.mxu0
    %352 = vmatpush.msra.mxu0 0.0
    %353 = vmatpush.msra.mxu0 0.0
    %354 = vmatpush.msra.mxu0 0.0
    %355 = vmatpush.msra.mxu0 0.0
    %356 = vmatpush.msra.mxu0 0.0
    %357 = vmatpush.msra.mxu0 0.0
    %358 = vmatpush.msra.mxu0 0.0
    %359 = vmatpush.msra.mxu0 0.0
    %360 = vmatpush.msra.mxu0 0.0
    %361 = vmatpush.msra.mxu0 0.0
    %362 = vmatpush.msra.mxu0 0.0
    %363 = vmatpush.msra.mxu0 0.0
    %364 = vmatpush.msra.mxu0 %v322
    %365 = vmatpush.msra.mxu0 %v320
    %366 = vmatpush.msra.mxu0 %v318
    %367 = vmatpush.msra.mxu0 %v316
    %368 = vmatmul.f32.gmra.mxu0 %v330
    %v369 = vpop.f32.mrf.mxu0
    %v370 = vadd.f32 %v326, %v369
    %371 = vdwg.mxu0
    %v374 = vrot.slane %v370, 4
    %vm375 = vcmask 1043456
    %v376 = vsel %vm375, %v350, %v374
    %378 = vst [vmem:[#allocation2] sm:$0x77] %v376
    %v379 = vmax.f32 %v350, 0.0
    %v380 = vmax.f32 %v370, 0.0
    %v381 = vand.u32 2147483647, %v350
    %v382 = vand.u32 2147483647, %v370
    %v383 = vsub.f32 0.0, %v381
    %v384 = vsub.f32 0.0, %v382
    %v385 = vmul.f32 %v383, 1.442695
    %v386 = vpow.pop %v385
    %v387 = vmul.f32 %v384, 1.442695
    %v388 = vpow.pop %v387
    %v389 = vadd.f32 %v386, 1.0
    %v390 = vlog2.pop %v389
    %v391 = vmul.f32 %v390, 0.6931472
    %v392 = vmul.f32 -0.5, %v386
    %v393 = vadd.f32 %v392, 1.0
    %v394 = vmul.f32 %v393, %v386
    %v395 = vand.u32 2147483647, %v386
    %vm396 = vcmp.lt.f32.partialorder %v395, 0.0004427343
    %v397 = vsel %vm396, %v394, %v391
    %v398 = vadd.f32 %v388, 1.0
    %v399 = vlog2.pop %v398
    %v400 = vmul.f32 %v399, 0.6931472
    %v401 = vmul.f32 -0.5, %v388
    %v402 = vadd.f32 %v401, 1.0
    %v403 = vmul.f32 %v402, %v388
    %v404 = vand.u32 2147483647, %v388
    %vm405 = vcmp.lt.f32.partialorder %v404, 0.0004427343
    %v406 = vsel %vm405, %v403, %v400
    %v407 = vadd.f32 %v379, %v397
    %v408 = vadd.f32 %v380, %v406
    %v411 = vrot.slane %v408, 4
    %v412 = vsel %vm375, %v407, %v411
    %v413 = vsel %vm375, %v411, %v407
    %v414 = vrot.slane %v413, 4
    %vm415 = vcmask 1040384
    %vm416 = vcmask 1044484
    %vm417 = vmor %vm415, %vm416
    %v418 = vrot.slane %v412, 7
    %v419 = vrot.slane %v418, 4
    %v420 = vrot.slane %v414, 7
    %v421 = vsel %vm417, %v419, %v420
    %423 = vst [vmem:[#allocation4] sm:$0x77] %v421
    // Predicated region
    $region10: #{tpu_custom_call.1} parent=1 // pred_check
      _
    $region11: #{tpu_custom_call.1} parent=1 // pred_check_branch
      %425 = sbr.rel (0) target = $region13
    $region12: #{tpu_custom_call.1} parent=1 // pred_region
      %427 = vsyncadd [#allocation3], 0
      %s429 = sshll.u32 [#allocation2], 4
      %s430 = int_to_ptr.vmem [resolvable:$true] %s429
      %s431 = sshll.u32 %s2, 4
      %s432 = int_to_ptr.hbm [resolvable:$true] %s431
      %434 = dma.vmem_to_hbm [thread:$0]  %s430, 128, %s432, [#allocation3]
    $region13: #{tpu_custom_call.1} parent=1 // pred_fallthru
      _
    // Predicated region
    $region14: #{tpu_custom_call.1} parent=1 // pred_check
      _
    $region15: #{tpu_custom_call.1} parent=1 // pred_check_branch
      %436 = sbr.rel (0) target = $region17
    $region16: #{tpu_custom_call.1} parent=1 // pred_region
      %438 = vsyncadd [#allocation5], 0
      %s440 = sshll.u32 [#allocation4], 4
      %s441 = int_to_ptr.vmem [resolvable:$true] %s440
      %s442 = sshll.u32 %s3, 4
      %s443 = int_to_ptr.hbm [resolvable:$true] %s442
      %445 = dma.vmem_to_hbm [thread:$0]  %s441, 128, %s443, [#allocation5]
    $region17: #{tpu_custom_call.1} parent=1 // pred_fallthru
      _
    // Predicated region
    $region18: #{tpu_custom_call.1} parent=1 // pred_check
      _
    $region19: #{tpu_custom_call.1} parent=1 // pred_check_branch
      %447 = sbr.rel (0) target = $region21
    $region20: #{tpu_custom_call.1} parent=1 // pred_region
      %449 = dma.done [#allocation3], 128
    $region21: #{tpu_custom_call.1} parent=1 // pred_fallthru
      _
    // Predicated region
    $region22: #{tpu_custom_call.1} parent=1 // pred_check
      _
    $region23: #{tpu_custom_call.1} parent=1 // pred_check_branch
      %451 = sbr.rel (0) target = $region25
    $region24: #{tpu_custom_call.1} parent=1 // pred_region
      %453 = dma.done [#allocation5], 128
    $region25: #{tpu_custom_call.1} parent=1 // pred_fallthru
      _
    %454 = vsyncpa [#allocation3], 1
    %455 = vsyncpa [#allocation5], 1

</llo_original>
